<compile_context>
chip_gen: v7x
topology: tpu7x:2x2x1
jax: 0.10.0
libtpu: 0.0.40
codegen_flags: <defaults>
</compile_context>

<pallas_src>
import jax
import jax.numpy as jnp
from jax.experimental import pallas as pl
from jax.experimental.pallas import tpu as pltpu


def _block_scores(hb_ref, enc_ref, we_ref, v_ref):
    """Scores for one batch block, returned as (Bt, S) with S on the lane axis."""
    S, Bt, E2 = enc_ref.shape
    dec = we_ref.shape[1]
    # One MXU matmul over all S*Bt rows of this block.  The (S, Bt, E2)->(S*Bt, E2)
    # reshape is a free relabel when Bt is a multiple of 8 (the production case);
    # for the tiny Bt == B fallback it is a small in-VMEM copy.
    enc2 = enc_ref[...].reshape(S * Bt, E2)                              # (S*Bt, E2)
    eproj = jnp.dot(enc2, we_ref[...],
                    preferred_element_type=jnp.float32)                  # (S*Bt, dec)
    # energy = tanh(enc @ We + (hidden @ Wh + b)); the hidden part is hoisted to
    # the wrapper and broadcast over the sequence axis here.
    energy = jnp.tanh(eproj.reshape(S, Bt, dec) + hb_ref[...])           # (S, Bt, dec)
    v = v_ref[...].reshape(1, 1, dec)
    scores = jnp.sum(energy * v, axis=2)                                 # (S, Bt)
    # Tiny XLU transpose so the softmax axis (S) becomes the lane axis.
    return jnp.transpose(scores)                                         # (Bt, S)


def _softmax_store(scores, out_ref):
    m = jnp.max(scores, axis=1, keepdims=True)                           # (Bt, 1)
    e = jnp.exp(scores - m)
    denom = jnp.sum(e, axis=1, keepdims=True)                            # (Bt, 1)
    # Reciprocal + multiply (EUP) instead of a divide chain.  approx=True would be
    # fully free but is kept off so the 1e-5 self-test against f32 division holds.
    out_ref[...] = e * pl.reciprocal(denom, approx=False)


def _attn_kernel(hb_ref, enc_ref, we_ref, v_ref, out_ref):
    # hb_ref:  (1, Bt, dec)  precomputed hidden @ Wh + bias (f32)
    # enc_ref: (S, Bt, E2)   encoder outputs, native seq-major layout
    # we_ref:  (E2, dec)     slice of attn_fc.weight^T acting on encoder outputs
    # v_ref:   (1, dec)      v_fc.weight (no bias)
    # out_ref: (Bt, S)       softmax attention weights (lane axis = S)
    _softmax_store(_block_scores(hb_ref, enc_ref, we_ref, v_ref), out_ref)


def _attn_kernel_masked(hb_ref, enc_ref, bias_ref, we_ref, v_ref, out_ref):
    # bias_ref: (Bt, S) additive mask bias: 0 where kept, -1e30 where masked.
    scores = _block_scores(hb_ref, enc_ref, we_ref, v_ref) + bias_ref[...]
    _softmax_store(scores, out_ref)


def _plan_blocks(B, S, E2, dec, enc_itemsize, masked):
    """Pick (Bt, B_pad, vmem_limit_bytes) from a generation-aware VMEM budget."""
    try:
        cap = int(pltpu.get_tpu_info().vmem_capacity_bytes)
    except Exception:  # interpret mode / info unavailable
        cap = 64 << 20
    # Working-set budget for the per-step footprint; leave the rest of VMEM for
    # compiler scratch.  v7x: 64 MiB physical -> tighter budget; v5e/v6e: 128 MiB
    # physical but only 16/32 MiB scoped by default, so raise vmem_limit_bytes.
    budget = (24 << 20) if cap <= (64 << 20) else (48 << 20)
    vmem_limit = int(min(cap - (8 << 20), 2 * budget))

    per_b = (2 * S * E2 * enc_itemsize        # enc block (double-buffered)
             + 2 * dec * 4                    # hidden-projection block
             + 2 * S * 4                      # output block
             + (2 * S * 4 if masked else 0)   # additive mask-bias block
             + 2 * S * dec * 4                # f32 eproj/energy temporaries
             + S * E2 * enc_itemsize)         # possible reshape copy of the enc tile
    fixed = 2 * (E2 * dec * enc_itemsize + dec * 4)        # weight tiles
    bt_cap = max(1, (max(budget - fixed, per_b)) // per_b)

    if B <= 8:
        return B, B, vmem_limit               # single block: Bt must equal B
    if B % 8 != 0 and B <= bt_cap:
        return B, B, vmem_limit               # ragged batch that fits one block
    B_pad = ((B + 7) // 8) * 8                # tile in multiples of 8 (f32 sublane)
    bt = max(min((bt_cap // 8) * 8, B_pad), 8)  # 8 is the minimum legal tile
    if B_pad >= 16:
        # Prefer >= 2 grid steps so the "parallel" batch axis can shard across
        # v7x's two TensorCores (negligible extra per-step cost on v5e/v6e).
        bt = max((min(bt, B_pad // 2) // 8) * 8, 8)
    while bt > 8 and B_pad % bt != 0:
        bt -= 8
    return bt, B_pad, vmem_limit


def attention_forward(hidden, encoder_outputs, attn_w, attn_b, v_w, mask=None,
                      matmul_dtype=None):
    """hidden: (B, dec); encoder_outputs: (S, B, 2*enc_hid) -- PyTorch conventions.

    matmul_dtype=None keeps the encoder operand in its incoming dtype (avoids a
    standalone HBM cast pass); pass jnp.bfloat16 explicitly for the bf16 MXU path.
    """
    S, B, E2 = encoder_outputs.shape
    dec = hidden.shape[1]

    # Split attn_fc.weight into the hidden part (Wh) and the encoder part (We) and
    # hoist the hidden projection out of the kernel (one tiny XLA matmul).
    wT = attn_w.T                                              # (dec + E2, dec)
    wh = wT[:dec, :]                                           # (dec, dec)
    we = wT[dec:, :]                                           # (E2,  dec)
    hb = (hidden.astype(jnp.float32) @ wh.astype(jnp.float32)
          + attn_b.astype(jnp.float32))[None, :, :]            # (1, B, dec)

    enc = encoder_outputs                                      # native (S, B, E2)
    if matmul_dtype is not None and enc.dtype != matmul_dtype:
        enc = enc.astype(matmul_dtype)                         # only on explicit request
    we_m = we.astype(enc.dtype)
    v = v_w.astype(jnp.float32)                                # (1, dec)

    masked = mask is not None
    if masked:
        # Additive bias: 0 where kept, -1e30 where masked (finite so fully-masked
        # rows give a uniform row instead of NaN; otherwise matches -inf exactly).
        bias = (mask.astype(jnp.float32) - 1.0) * jnp.float32(1e30)   # (B, S)

    Bt, B_pad, vmem_limit = _plan_blocks(
        B, S, E2, dec, jnp.dtype(enc.dtype).itemsize, masked)
    if B_pad != B:
        pad = B_pad - B
        enc = jnp.pad(enc, ((0, 0), (0, pad), (0, 0)))
        hb = jnp.pad(hb, ((0, 0), (0, pad), (0, 0)))
        if masked:
            bias = jnp.pad(bias, ((0, pad), (0, 0)))

    in_specs = [
        pl.BlockSpec((1, Bt, dec), lambda i: (0, i, 0)),       # hidden projection
        pl.BlockSpec((S, Bt, E2), lambda i: (0, i, 0)),        # encoder (seq-major)
    ]
    args = [hb, enc]
    if masked:
        in_specs.append(pl.BlockSpec((Bt, S), lambda i: (i, 0)))
        args.append(bias)
        kernel = _attn_kernel_masked
    else:
        kernel = _attn_kernel
    in_specs += [
        pl.BlockSpec((E2, dec), lambda i: (0, 0)),             # We (grid-invariant)
        pl.BlockSpec((1, dec), lambda i: (0, 0)),              # v  (grid-invariant)
    ]
    args += [we_m, v]

    out = pl.pallas_call(
        kernel,
        out_shape=jax.ShapeDtypeStruct((B_pad, S), jnp.float32),
        grid_spec=pltpu.PrefetchScalarGridSpec(
            num_scalar_prefetch=0,
            grid=(B_pad // Bt,),
            in_specs=in_specs,
            out_specs=pl.BlockSpec((Bt, S), lambda i: (i, 0)),  # lane-dense in S
        ),
        compiler_params=pltpu.CompilerParams(
            dimension_semantics=("parallel",),
            vmem_limit_bytes=vmem_limit,
        ),
    )(*args)
    return out[:B] if B_pad != B else out                      # (B, S)


def _reference(hidden, encoder_outputs, attn_w, attn_b, v_w, mask=None):
    """Pure-JAX mirror of the PyTorch forward pass for verification."""
    S = encoder_outputs.shape[0]
    h = jnp.repeat(hidden[:, None, :], S, axis=1)                  # (B, S, dec)
    enc = jnp.transpose(encoder_outputs, (1, 0, 2))                # (B, S, E2)
    cat = jnp.concatenate([h, enc], axis=2)                        # (B, S, dec+E2)
    energy = jnp.tanh(cat @ attn_w.T + attn_b)                     # (B, S, dec)
    attention = (energy @ v_w.T)[..., 0]                           # (B, S)
    if mask is not None:
        attention = jnp.where(mask == 0, -jnp.inf, attention)
    return jax.nn.softmax(attention, axis=1)


if __name__ == "__main__":
    B, S, enc_hid, dec_hid = 2, 8, 16, 32
    E2 = 2 * enc_hid

    key = jax.random.PRNGKey(0)
    k1, k2, k3, k4, k5 = jax.random.split(key, 5)
    hidden = jax.random.normal(k1, (B, dec_hid), jnp.float32)
    encoder_outputs = jax.random.normal(k2, (S, B, E2), jnp.float32)
    # Deterministic synthetic parameters (nn.Linear shapes from __init__).
    attn_w = jax.random.normal(k3, (dec_hid, E2 + dec_hid), jnp.float32) * 0.1
    attn_b = jax.random.normal(k4, (dec_hid,), jnp.float32) * 0.1
    v_w = jax.random.normal(k5, (1, dec_hid), jnp.float32) * 0.1

    # Unmasked path (no mask operand is DMA'd at all).
    out = attention_forward(hidden, encoder_outputs, attn_w, attn_b, v_w)
    jax.block_until_ready(out)
    ref = _reference(hidden, encoder_outputs, attn_w, attn_b, v_w)
    assert out.shape == (B, S)
    assert jnp.allclose(out, ref, atol=1e-5, rtol=1e-5), "mismatch vs reference (no mask)"

    # Partially-masked path (no fully-masked row, so the finite -1e30 bias matches
    # PyTorch's -inf semantics exactly; fully-masked rows would give NaN in PyTorch
    # but a uniform distribution here by design).
    mask = jnp.array([[1, 1, 1, 0, 0, 1, 1, 0],
                      [0, 1, 1, 1, 1, 1, 1, 1]], dtype=jnp.int32)
    out_m = attention_forward(hidden, encoder_outputs, attn_w, attn_b, v_w, mask=mask)
    jax.block_until_ready(out_m)
    ref_m = _reference(hidden, encoder_outputs, attn_w, attn_b, v_w, mask=mask)
    assert jnp.allclose(out_m, ref_m, atol=1e-5, rtol=1e-5), "mismatch vs reference (mask)"

    print("KERNEL_OK")
</pallas_src>

<mosaic_0001>
module attributes {stable_mosaic.version = 11 : i64} {
  func.func @_attn_kernel(%arg0: i32, %arg1: memref<1x2x32xf32, #tpu.memory_space<vmem>>, %arg2: memref<8x2x32xf32, #tpu.memory_space<vmem>>, %arg3: memref<32x32xf32, #tpu.memory_space<vmem>>, %arg4: memref<1x32xf32, #tpu.memory_space<vmem>>, %arg5: memref<2x8xf32, #tpu.memory_space<vmem>>) attributes {dimension_semantics = [#tpu.dimension_semantics<parallel>], iteration_bounds = array<i64: 1>, scalar_prefetch = 0 : i64, scratch_operands = 0 : i64, tpu.core_type = #tpu.core_type<tc>, window_params = [{transform_indices = @transform_0, window_bounds = array<i64: 1, 2, 32>}, {transform_indices = @transform_1, window_bounds = array<i64: 8, 2, 32>}, {pipeline_mode = #tpu.pipeline_mode<synchronous>, transform_indices = @transform_2, window_bounds = array<i64: 32, 32>}, {pipeline_mode = #tpu.pipeline_mode<synchronous>, transform_indices = @transform_3, window_bounds = array<i64: 1, 32>}, {transform_indices = @transform_4, window_bounds = array<i64: 2, 8>}]} {
    %c0 = arith.constant 0 : index
    %c0_0 = arith.constant 0 : index
    %c0_1 = arith.constant 0 : index
    %0 = vector.load %arg2[%c0, %c0_0, %c0_1] : memref<8x2x32xf32, #tpu.memory_space<vmem>>, vector<8x2x32xf32>
    %1 = vector.shape_cast %0 : vector<8x2x32xf32> to vector<16x32xf32>
    %c0_2 = arith.constant 0 : index
    %c0_3 = arith.constant 0 : index
    %2 = vector.load %arg3[%c0_2, %c0_3] : memref<32x32xf32, #tpu.memory_space<vmem>>, vector<32x32xf32>
    %cst = arith.constant dense<0.000000e+00> : vector<16x32xf32>
    %3 = tpu.matmul %1, %2, %cst {dimension_numbers = #tpu.dot_dimension_numbers<[1], [0], [0], [1], [0, 0, 1, 1], [], []>} : vector<16x32xf32>, vector<32x32xf32>, vector<16x32xf32> -> vector<16x32xf32>
    %4 = vector.shape_cast %3 : vector<16x32xf32> to vector<8x2x32xf32>
    %c0_4 = arith.constant 0 : index
    %c0_5 = arith.constant 0 : index
    %c0_6 = arith.constant 0 : index
    %5 = vector.load %arg1[%c0_4, %c0_5, %c0_6] : memref<1x2x32xf32, #tpu.memory_space<vmem>>, vector<1x2x32xf32>
    %6 = vector.broadcast %5 : vector<1x2x32xf32> to vector<8x2x32xf32>
    %7 = arith.addf %4, %6 : vector<8x2x32xf32>
    %8 = math.tanh %7 : vector<8x2x32xf32>
    %c0_7 = arith.constant 0 : index
    %c0_8 = arith.constant 0 : index
    %9 = vector.load %arg4[%c0_7, %c0_8] : memref<1x32xf32, #tpu.memory_space<vmem>>, vector<1x32xf32>
    %10 = vector.shape_cast %9 : vector<1x32xf32> to vector<1x1x32xf32>
    %11 = vector.broadcast %10 : vector<1x1x32xf32> to vector<8x2x32xf32>
    %12 = arith.mulf %8, %11 : vector<8x2x32xf32>
    %cst_9 = arith.constant dense<0.000000e+00> : vector<8x2xf32>
    %13 = vector.multi_reduction <add>, %12, %cst_9 [2] : vector<8x2x32xf32> to vector<8x2xf32>
    %14 = tpu.transpose %13, [1, 0] : vector<8x2xf32> -> vector<2x8xf32>
    %cst_10 = arith.constant dense<0xFF800000> : vector<2xf32>
    %15 = vector.multi_reduction <maximumf>, %14, %cst_10 [1] : vector<2x8xf32> to vector<2xf32>
    %16 = vector.shape_cast %15 : vector<2xf32> to vector<2x1xf32>
    %17 = vector.broadcast %16 : vector<2x1xf32> to vector<2x8xf32>
    %18 = arith.subf %14, %17 : vector<2x8xf32>
    %19 = math.exp %18 : vector<2x8xf32>
    %cst_11 = arith.constant dense<0.000000e+00> : vector<2xf32>
    %20 = vector.multi_reduction <add>, %19, %cst_11 [1] : vector<2x8xf32> to vector<2xf32>
    %21 = vector.shape_cast %20 : vector<2xf32> to vector<2x1xf32>
    %22 = tpu.reciprocal %21 : vector<2x1xf32> -> vector<2x1xf32>
    %23 = vector.broadcast %22 : vector<2x1xf32> to vector<2x8xf32>
    %24 = arith.mulf %19, %23 : vector<2x8xf32>
    %c0_12 = arith.constant 0 : index
    %c0_13 = arith.constant 0 : index
    %25 = vector.load %arg5[%c0_12, %c0_13] : memref<2x8xf32, #tpu.memory_space<vmem>>, vector<2x8xf32>
    tpu.vector_store %arg5[%c0_12, %c0_13], %24 {strides = array<i32>} : memref<2x8xf32, #tpu.memory_space<vmem>>, vector<2x8xf32>,
    return
  }
  func.func @transform_0(%arg0: i32) -> (i32, i32, i32) {
    %c0_i32 = arith.constant 0 : i32
    %c0_i32_0 = arith.constant 0 : i32
    %c0_i32_1 = arith.constant 0 : i32
    return %c0_i32, %arg0, %c0_i32_0 : i32, i32, i32
  }
  func.func @transform_1(%arg0: i32) -> (i32, i32, i32) {
    %c0_i32 = arith.constant 0 : i32
    %c0_i32_0 = arith.constant 0 : i32
    %c0_i32_1 = arith.constant 0 : i32
    return %c0_i32, %arg0, %c0_i32_0 : i32, i32, i32
  }
  func.func @transform_2(%arg0: i32) -> (i32, i32) {
    %c0_i32 = arith.constant 0 : i32
    %c0_i32_0 = arith.constant 0 : i32
    %c0_i32_1 = arith.constant 0 : i32
    return %c0_i32, %c0_i32_0 : i32, i32
  }
  func.func @transform_3(%arg0: i32) -> (i32, i32) {
    %c0_i32 = arith.constant 0 : i32
    %c0_i32_0 = arith.constant 0 : i32
    %c0_i32_1 = arith.constant 0 : i32
    return %c0_i32, %c0_i32_0 : i32, i32
  }
  func.func @transform_4(%arg0: i32) -> (i32, i32) {
    %c0_i32 = arith.constant 0 : i32
    %c0_i32_0 = arith.constant 0 : i32
    return %arg0, %c0_i32 : i32, i32
  }
}

</mosaic_0001>

<llo_original>
// kernel: tpu_custom_call.1
$region0: #{tpu_custom_call.1}
  #allocation0 [shape = 'u32[]', space=smem, size = 0x4, offset = 0x4, fixed_abs, tag = 'smem constant byte address 0x4 - core index']
  #allocation1 [shape = 'u32[144,128]{1,0:T(1,128)}', space=vmem, size = 0x12000, scoped, tag = 'internal scratch']
  %s0 = inlined_call_operand.hbm [shape: f32[1,2,32], index: 0, kind: input, shape index: {}]
  %s1 = inlined_call_operand.hbm [shape: f32[8,2,32], index: 1, kind: input, shape index: {}]
  %s2 = inlined_call_operand.hbm [shape: f32[32,32], index: 2, kind: input, shape index: {}]
  %s3 = inlined_call_operand.vmem [shape: f32[1,32], index: 3, kind: input, shape index: {}]
  %s4 = inlined_call_operand.hbm [shape: f32[2,8], index: 4, kind: output, shape index: {}]
  %s5 = sld [smem:[#allocation0]]
  $region38: #{tpu_custom_call.1} parent=0
    _
  %s7 = ssub.s32 1, %s5
  %s8 = scalar_select 0, %s7, %s5
  $region1: #{tpu_custom_call.1} parent=0
    #allocation2 [shape = 'u8[1024]{0}', space=vmem, size = 0x400, scoped, tag = 'input window, operand 0, single buffered']
    #allocation3 [shape = 's32[1]{0}', space=sflag, size = 0x4, scoped, tag = 'scoped memory for tpu_custom_call.1']
    #allocation4 [shape = 's32[1]{0}', space=sflag, size = 0x4, scoped, tag = 'scoped memory for tpu_custom_call.1']
    #allocation5 [shape = 'u8[8192]{0}', space=vmem, size = 0x2000, scoped, tag = 'input window, operand 1, single buffered']
    #allocation6 [shape = 's32[1]{0}', space=sflag, size = 0x4, scoped, tag = 'scoped memory for tpu_custom_call.1']
    #allocation7 [shape = 'u8[16384]{0}', space=vmem, size = 0x4000, scoped, tag = 'input window, operand 2, single buffered']
    #allocation8 [shape = 'u8[1024]{0}', space=vmem, size = 0x400, scoped, tag = 'output window, operand 0, single buffered']
    %9 = vsyncpa [#allocation3], 0
    %10 = vsyncpa [#allocation6], 0
    %11 = vsyncpa [#allocation4], 0
    // Predicated region
    $region2: #{tpu_custom_call.1} parent=1 // pred_check
      _
    $region3: #{tpu_custom_call.1} parent=1 // pred_check_branch
      %13 = sbr.rel (0) target = $region5
    $region4: #{tpu_custom_call.1} parent=1 // pred_region
      %s15 = ssub.s32 32, 32
      %16 = vsyncadd [#allocation3], %s15
      %s18 = sshll.u32 [#allocation2], 4
      %s19 = int_to_ptr.vmem [resolvable:$true] %s18
      %21 = dma.hbm_to_vmem [thread:$0]  %s0, 32, %s19, [#allocation3]
    $region5: #{tpu_custom_call.1} parent=1 // pred_fallthru
      _
    // Predicated region
    $region6: #{tpu_custom_call.1} parent=1 // pred_check
      _
    $region7: #{tpu_custom_call.1} parent=1 // pred_check_branch
      %23 = sbr.rel (0) target = $region9
    $region8: #{tpu_custom_call.1} parent=1 // pred_region
      %s25 = ssub.s32 256, 256
      %26 = vsyncadd [#allocation6], %s25
      %s27 = sshll.u32 [#allocation5], 4
      %s28 = int_to_ptr.vmem [resolvable:$true] %s27
      %33 = dma.hbm_to_vmem [thread:$0]  %s1, 256, %s28, [#allocation6], 32, 32, 2
    $region9: #{tpu_custom_call.1} parent=1 // pred_fallthru
      _
    // Predicated region
    $region10: #{tpu_custom_call.1} parent=1 // pred_check
      _
    $region11: #{tpu_custom_call.1} parent=1 // pred_check_branch
      %35 = sbr.rel (0) target = $region13
    $region12: #{tpu_custom_call.1} parent=1 // pred_region
      %s37 = ssub.s32 512, 512
      %38 = vsyncadd [#allocation6], %s37
      %s39 = sshll.u32 [#allocation7], 4
      %s40 = int_to_ptr.vmem [resolvable:$true] %s39
      %45 = dma.hbm_to_vmem [thread:$0]  %s2, 512, %s40, [#allocation6], 128, 128, 8
    $region13: #{tpu_custom_call.1} parent=1 // pred_fallthru
      _
    // Predicated region
    $region14: #{tpu_custom_call.1} parent=1 // pred_check
      _
    $region15: #{tpu_custom_call.1} parent=1 // pred_check_branch
      %47 = sbr.rel (0) target = $region17
    $region16: #{tpu_custom_call.1} parent=1 // pred_region
      _
    $region17: #{tpu_custom_call.1} parent=1 // pred_fallthru
      _
    // Predicated region
    $region18: #{tpu_custom_call.1} parent=1 // pred_check
      _
    $region19: #{tpu_custom_call.1} parent=1 // pred_check_branch
      %49 = sbr.rel (0) target = $region21
    $region20: #{tpu_custom_call.1} parent=1 // pred_region
      %50 = dma.done [#allocation3], 32
    $region21: #{tpu_custom_call.1} parent=1 // pred_fallthru
      _
    // Predicated region
    $region22: #{tpu_custom_call.1} parent=1 // pred_check
      _
    $region23: #{tpu_custom_call.1} parent=1 // pred_check_branch
      %52 = sbr.rel (0) target = $region25
    $region24: #{tpu_custom_call.1} parent=1 // pred_region
      %53 = dma.done [#allocation6], 256
    $region25: #{tpu_custom_call.1} parent=1 // pred_fallthru
      _
    // Predicated region
    $region26: #{tpu_custom_call.1} parent=1 // pred_check
      _
    $region27: #{tpu_custom_call.1} parent=1 // pred_check_branch
      %55 = sbr.rel (0) target = $region29
    $region28: #{tpu_custom_call.1} parent=1 // pred_region
      %56 = dma.done [#allocation6], 512
    $region29: #{tpu_custom_call.1} parent=1 // pred_fallthru
      _
    %v57 = vld [vmem:[#allocation5] sm:$0x3]
    %v58 = vld [vmem:[#allocation5 + $0x2] sm:$0x3]
    %v59 = vld [vmem:[#allocation5 + $0x4] sm:$0x3]
    %v60 = vld [vmem:[#allocation5 + $0x6] sm:$0x3]
    %v61 = vld [vmem:[#allocation5 + $0x8] sm:$0x3]
    %v62 = vld [vmem:[#allocation5 + $0xa] sm:$0x3]
    %v63 = vld [vmem:[#allocation5 + $0xc] sm:$0x3]
    %v64 = vld [vmem:[#allocation5 + $0xe] sm:$0x3]
    %v65 = vld [vmem:[#allocation7] sm:$0xff]
    %v66 = vld [vmem:[#allocation7 + $0x8] sm:$0xff]
    %v67 = vld [vmem:[#allocation7 + $0x10] sm:$0xff]
    %v68 = vld [vmem:[#allocation7 + $0x18] sm:$0xff]
    %v77 = vcombine.low %v57, %v58
    %v78 = vcombine.low %v59, %v60
    %v80 = vunpack.c.l.s4 1983009808
    %v81 = vunpack.c.0.s8 %v80
    %v82 = vlaneseq
    %v83 = vshrl.u32 %v82, 7
    %v84 = vsub.s32 %v81, %v83
    %v85 = vrot.slane %v77, %v84
    %v87 = vunpack.c.l.s4 1983009808
    %v88 = vunpack.c.0.s8 %v87
    %v89 = vlaneseq
    %v90 = vshrl.u32 %v89, 7
    %v91 = vsub.s32 %v88, %v90
    %v92 = vrot.slane %v78, %v91
    %v93 = vcombine.low %v85, %v92
    %v94 = vcombine.low %v61, %v62
    %v95 = vcombine.low %v63, %v64
    %v97 = vunpack.c.l.s4 1983009808
    %v98 = vunpack.c.0.s8 %v97
    %v99 = vlaneseq
    %v100 = vshrl.u32 %v99, 7
    %v101 = vsub.s32 %v98, %v100
    %v102 = vrot.slane %v94, %v101
    %v104 = vunpack.c.l.s4 1983009808
    %v105 = vunpack.c.0.s8 %v104
    %v106 = vlaneseq
    %v107 = vshrl.u32 %v106, 7
    %v108 = vsub.s32 %v105, %v107
    %v109 = vrot.slane %v95, %v108
    %v110 = vcombine.low %v102, %v109
    %vm111 = vcmask 261120
    %v112 = vsel %vm111, %v93, 0
    %v114 = vsel %vm111, %v110, 0
    %116 = vmatprep.subr.mxu0 0.0
    %117 = vmatpush1.msra.mxu0 %v65
    %118 = vmatprep.subr.mxu0 0.0
    %119 = vmatpush1.msra.mxu0 %v66
    %120 = vmatprep.subr.mxu0 0.0
    %121 = vmatpush1.msra.mxu0 %v67
    %122 = vmatprep.subr.mxu0 0.0
    %123 = vmatpush1.msra.mxu0 %v68
    %124 = vmatprep.subr.mxu0 0.0
    %125 = vmatpush1.msra.mxu0 0.0
    %126 = vmatprep.subr.mxu0 0.0
    %127 = vmatpush1.msra.mxu0 0.0
    %128 = vmatprep.subr.mxu0 0.0
    %129 = vmatpush1.msra.mxu0 0.0
    %130 = vmatprep.subr.mxu0 0.0
    %131 = vmatpush1.msra.mxu0 0.0
    %132 = vmatprep.subr.mxu0 0.0
    %133 = vmatpush1.msra.mxu0 0.0
    %134 = vmatprep.subr.mxu0 0.0
    %135 = vmatpush1.msra.mxu0 0.0
    %136 = vmatprep.subr.mxu0 0.0
    %137 = vmatpush1.msra.mxu0 0.0
    %138 = vmatprep.subr.mxu0 0.0
    %139 = vmatpush1.msra.mxu0 0.0
    %140 = vmatprep.subr.mxu0 0.0
    %141 = vmatpush1.msra.mxu0 0.0
    %142 = vmatprep.subr.mxu0 0.0
    %143 = vmatpush1.msra.mxu0 0.0
    %144 = vmatprep.subr.mxu0 0.0
    %145 = vmatpush1.msra.mxu0 0.0
    %146 = vmatprep.subr.mxu0 0.0
    %147 = vmatpush1.msra.mxu0 0.0
    %148 = vmatprep.subr.mxu0 0.0
    %149 = vmatpush1.msra.mxu0 0.0
    %150 = vmatprep.subr.mxu0 0.0
    %151 = vmatpush1.msra.mxu0 0.0
    %152 = vmatprep.subr.mxu0 0.0
    %153 = vmatpush1.msra.mxu0 0.0
    %154 = vmatprep.subr.mxu0 0.0
    %155 = vmatpush1.msra.mxu0 0.0
    %156 = vmatprep.subr.mxu0 0.0
    %157 = vmatpush1.msra.mxu0 0.0
    %158 = vmatprep.subr.mxu0 0.0
    %159 = vmatpush1.msra.mxu0 0.0
    %160 = vmatprep.subr.mxu0 0.0
    %161 = vmatpush1.msra.mxu0 0.0
    %162 = vmatprep.subr.mxu0 0.0
    %163 = vmatpush1.msra.mxu0 0.0
    %164 = vmatprep.subr.mxu0 0.0
    %165 = vmatpush1.msra.mxu0 0.0
    %166 = vmatprep.subr.mxu0 0.0
    %167 = vmatpush1.msra.mxu0 0.0
    %168 = vmatprep.subr.mxu0 0.0
    %169 = vmatpush1.msra.mxu0 0.0
    %170 = vmatprep.subr.mxu0 0.0
    %171 = vmatpush1.msra.mxu0 0.0
    %172 = vmatprep.subr.mxu0 0.0
    %173 = vmatpush1.msra.mxu0 0.0
    %174 = vmatprep.subr.mxu0 0.0
    %175 = vmatpush1.msra.mxu0 0.0
    %176 = vmatprep.subr.mxu0 0.0
    %177 = vmatpush1.msra.mxu0 0.0
    %178 = vmatprep.subr.mxu0 0.0
    %179 = vmatpush1.msra.mxu0 0.0
    %180 = vmatprep.mubr.f32.mxu0 0.0
    %181 = vmatmul.mubr.f32.gmra.mrb[0].mxu0 %v112
    %v182 = vpop.f32.mrb[0].mxu0
    %v183 = vadd.f32 0.0, %v182
    %v184 = vpop.f32.mrb[0].mxu0
    %185 = vmatprep.mubr.f32.mxu0 0.0
    %186 = vmatmul.mubr.f32.gmra.mrb[0].mxu0 %v114
    %v187 = vpop.f32.mrb[0].mxu0
    %v188 = vadd.f32 0.0, %v187
    %v189 = vpop.f32.mrb[0].mxu0
    %190 = vdwg.mxu0
    %v193 = vcombine.high %v183, %v183
    %v195 = vunpack.c.l.s4 1983009808
    %v196 = vunpack.c.0.s8 %v195
    %v197 = vlaneseq
    %v198 = vshrl.u32 %v197, 7
    %v199 = vsub.s32 %v196, %v198
    %v200 = vrot.slane %v183, %v199
    %v202 = vunpack.c.l.s4 1983009808
    %v203 = vunpack.c.0.s8 %v202
    %v204 = vlaneseq
    %v205 = vshrl.u32 %v204, 7
    %v206 = vsub.s32 %v203, %v205
    %v207 = vrot.slane %v193, %v206
    %v208 = vcombine.high %v200, %v200
    %v209 = vcombine.high %v207, %v207
    %v210 = vcombine.high %v188, %v188
    %v212 = vunpack.c.l.s4 1983009808
    %v213 = vunpack.c.0.s8 %v212
    %v214 = vlaneseq
    %v215 = vshrl.u32 %v214, 7
    %v216 = vsub.s32 %v213, %v215
    %v217 = vrot.slane %v188, %v216
    %v219 = vunpack.c.l.s4 1983009808
    %v220 = vunpack.c.0.s8 %v219
    %v221 = vlaneseq
    %v222 = vshrl.u32 %v221, 7
    %v223 = vsub.s32 %v220, %v222
    %v224 = vrot.slane %v210, %v223
    %v225 = vcombine.high %v217, %v217
    %v226 = vcombine.high %v224, %v224
    %v235 = vld [vmem:[#allocation2] sm:$0x3]
    %v236 = vadd.f32 %v200, %v235
    %v237 = vadd.f32 %v208, %v235
    %v238 = vadd.f32 %v207, %v235
    %v239 = vadd.f32 %v209, %v235
    %v240 = vadd.f32 %v217, %v235
    %v241 = vadd.f32 %v225, %v235
    %v242 = vadd.f32 %v224, %v235
    %v243 = vadd.f32 %v226, %v235
    %v244 = vtanh.pop %v236
    %v245 = vtanh.pop %v237
    %v246 = vtanh.pop %v238
    %v247 = vtanh.pop %v239
    %v248 = vtanh.pop %v240
    %v249 = vtanh.pop %v241
    %v250 = vtanh.pop %v242
    %v251 = vtanh.pop %v243
    %v252 = vld [vmem:[%s3] sm:$0x1]
    %v254 = vlaneseq
    %v255 = vshrl.u32 %v254, 7
    %v256 = vsub.s32 0, %v255
    %v257 = vrot.slane %v252, %v256
    %v259 = vmul.f32 %v244, %v257
    %v260 = vmul.f32 %v245, %v257
    %v261 = vmul.f32 %v246, %v257
    %v262 = vmul.f32 %v247, %v257
    %v263 = vmul.f32 %v248, %v257
    %v264 = vmul.f32 %v249, %v257
    %v265 = vmul.f32 %v250, %v257
    %v266 = vmul.f32 %v251, %v257
    %vm267 = vcmask 254976
    %v268 = vsel %vm267, %v259, 0.0
    %269 = vadd.xlane.f32.xlu0 %v268
    %v270 = vpop.xlane.xlu0 %269
    %v271 = vsel %vm267, %v260, 0.0
    %272 = vadd.xlane.f32.xlu0 %v271
    %v273 = vpop.xlane.xlu0 %272
    %v274 = vsel %vm267, %v261, 0.0
    %275 = vadd.xlane.f32.xlu0 %v274
    %v276 = vpop.xlane.xlu0 %275
    %v277 = vsel %vm267, %v262, 0.0
    %278 = vadd.xlane.f32.xlu0 %v277
    %v279 = vpop.xlane.xlu0 %278
    %v280 = vsel %vm267, %v263, 0.0
    %281 = vadd.xlane.f32.xlu0 %v280
    %v282 = vpop.xlane.xlu0 %281
    %v283 = vsel %vm267, %v264, 0.0
    %284 = vadd.xlane.f32.xlu0 %v283
    %v285 = vpop.xlane.xlu0 %284
    %v286 = vsel %vm267, %v265, 0.0
    %287 = vadd.xlane.f32.xlu0 %v286
    %v288 = vpop.xlane.xlu0 %287
    %v289 = vsel %vm267, %v266, 0.0
    %290 = vadd.xlane.f32.xlu0 %v289
    %v291 = vpop.xlane.xlu0 %290
    %v300 = vlaneseq
    %v301 = vand.u32 %v300, 127
    %v302 = vlaneseq
    %v303 = vshrl.u32 %v302, 7
    %v304 = vsub.s32 %v301, %v303
    %v305 = vrot.slane %v270, %v304
    %v306 = vlaneseq
    %v307 = vshrl.u32 %v306, 7
    %v308 = vsub.s32 %v301, %v307
    %v309 = vrot.slane %v273, %v308
    %v310 = vlaneseq
    %v311 = vshrl.u32 %v310, 7
    %v312 = vsub.s32 %v301, %v311
    %v313 = vrot.slane %v276, %v312
    %v314 = vlaneseq
    %v315 = vshrl.u32 %v314, 7
    %v316 = vsub.s32 %v301, %v315
    %v317 = vrot.slane %v279, %v316
    %v318 = vlaneseq
    %v319 = vshrl.u32 %v318, 7
    %v320 = vsub.s32 %v301, %v319
    %v321 = vrot.slane %v282, %v320
    %v322 = vlaneseq
    %v323 = vshrl.u32 %v322, 7
    %v324 = vsub.s32 %v301, %v323
    %v325 = vrot.slane %v285, %v324
    %v326 = vlaneseq
    %v327 = vshrl.u32 %v326, 7
    %v328 = vsub.s32 %v301, %v327
    %v329 = vrot.slane %v288, %v328
    %v330 = vlaneseq
    %v331 = vshrl.u32 %v330, 7
    %v332 = vsub.s32 %v301, %v331
    %v333 = vrot.slane %v291, %v332
    %vm334 = vcmask 1041409
    %v335 = vsel %vm334, %v309, %v305
    %vm336 = vcmask 1042434
    %v337 = vsel %vm336, %v313, %v335
    %vm338 = vcmask 1043459
    %v339 = vsel %vm338, %v317, %v337
    %vm340 = vcmask 1044484
    %v341 = vsel %vm340, %v321, %v339
    %vm342 = vcmask 1045509
    %v343 = vsel %vm342, %v325, %v341
    %vm344 = vcmask 1046534
    %v345 = vsel %vm344, %v329, %v343
    %vm346 = vcmask 1047559
    %v347 = vsel %vm346, %v333, %v345
    %349 = vxpose.xlu0.b32.start [1/16] %v347, 128
    %350 = vxpose.xlu0.b32.cont [2/16] 0.0, 128
    %351 = vxpose.xlu0.b32.cont [3/16] 0.0, 128
    %352 = vxpose.xlu0.b32.cont [4/16] 0.0, 128
    %353 = vxpose.xlu0.b32.cont [5/16] 0.0, 128
    %354 = vxpose.xlu0.b32.cont [6/16] 0.0, 128
    %355 = vxpose.xlu0.b32.cont [7/16] 0.0, 128
    %356 = vxpose.xlu0.b32.cont [8/16] 0.0, 128
    %357 = vxpose.xlu0.b32.cont [9/16] 0.0, 128
    %358 = vxpose.xlu0.b32.cont [10/16] 0.0, 128
    %359 = vxpose.xlu0.b32.cont [11/16] 0.0, 128
    %360 = vxpose.xlu0.b32.cont [12/16] 0.0, 128
    %361 = vxpose.xlu0.b32.cont [13/16] 0.0, 128
    %362 = vxpose.xlu0.b32.cont [14/16] 0.0, 128
    %363 = vxpose.xlu0.b32.cont [15/16] 0.0, 128
    %364 = vxpose.xlu0.b32.end [16/16] 0.0, 128
    %v365 = vpop.trf.xlu0
    %v366 = vpop.trf.xlu0
    %v367 = vpop.trf.xlu0
    %v368 = vpop.trf.xlu0
    %v369 = vpop.trf.xlu0
    %v370 = vpop.trf.xlu0
    %v371 = vpop.trf.xlu0
    %v372 = vpop.trf.xlu0
    %v373 = vpop.trf.xlu0
    %v374 = vpop.trf.xlu0
    %v375 = vpop.trf.xlu0
    %v376 = vpop.trf.xlu0
    %v377 = vpop.trf.xlu0
    %v378 = vpop.trf.xlu0
    %v379 = vpop.trf.xlu0
    %v380 = vpop.trf.xlu0
    %vm381 = vcmask 58368
    %v382 = vsel %vm381, %v365, -inf
    %383 = vmax.xlane.f32.xlu0 %v382
    %v384 = vpop.xlane.xlu0 %383
    %v385 = vsub.f32 %v365, %v384
    %v386 = vmul.f32 %v385, 1.442695
    %v387 = vpow.pop %v386
    %v388 = vsel %vm381, %v387, 0.0
    %389 = vadd.xlane.f32.xlu0 %v388
    %v390 = vpop.xlane.xlu0 %389
    %v391 = vrcp.pop %v390
    %v392 = vmul.f32 %v387, %v391
    %393 = vst.msk [vmem:[#allocation8] sm:$0x3] %vm381, %v392
    // Predicated region
    $region30: #{tpu_custom_call.1} parent=1 // pred_check
      _
    $region31: #{tpu_custom_call.1} parent=1 // pred_check_branch
      %395 = sbr.rel (0) target = $region33
    $region32: #{tpu_custom_call.1} parent=1 // pred_region
      %s397 = ssub.s32 32, 32
      %398 = vsyncadd [#allocation4], %s397
      %s400 = sshll.u32 [#allocation8], 4
      %s401 = int_to_ptr.vmem [resolvable:$true] %s400
      %403 = dma.vmem_to_hbm [thread:$0]  %s401, 32, %s4, [#allocation4]
    $region33: #{tpu_custom_call.1} parent=1 // pred_fallthru
      _
    // Predicated region
    $region34: #{tpu_custom_call.1} parent=1 // pred_check
      _
    $region35: #{tpu_custom_call.1} parent=1 // pred_check_branch
      %405 = sbr.rel (0) target = $region37
    $region36: #{tpu_custom_call.1} parent=1 // pred_region
      %406 = dma.done [#allocation4], 32
    $region37: #{tpu_custom_call.1} parent=1 // pred_fallthru
      _
    %407 = vsyncpa [#allocation3], 1
    %408 = vsyncpa [#allocation6], 1
    %409 = vsyncpa [#allocation4], 1

</llo_original>
